<compile_context>
chip_gen: v7x
topology: tpu7x:2x2x1
jax: 0.10.0
libtpu: 0.0.40
codegen_flags: <defaults>
</compile_context>

<pallas_src>
import functools

import jax
import jax.numpy as jnp
from jax.experimental import pallas as pl
from jax.experimental.pallas import tpu as pltpu


# ---------------------------------------------------------------------------
# Kernels.  Common layout:
#   lhs  : (M, K)    streamed as (tm, tk) tiles                     (bf16)
#   rhs  : (K, C)    fully VMEM-resident (constant block index)      (bf16)
#   bias : (1, C)    resident                                        (f32)
#   out  : (M, Cout) tiled (tm, Cout), lane-dense (Cout % 128 == 0)
# Grid = (row_tiles, k_tiles); reduction axis last, marked "arbitrary".
# ---------------------------------------------------------------------------
def _matmul_epilogue_kernel(lhs_ref, rhs_ref, bias_ref, out_ref, acc_ref, *, relu):
    """out = act(lhs @ rhs + bias); f32 accumulation in a VMEM scratch."""
    k = pl.program_id(1)

    @pl.when(k == 0)
    def _init():
        acc_ref[...] = jnp.zeros_like(acc_ref)

    tk = lhs_ref.shape[1]                      # static block size
    start = pl.multiple_of(k * tk, tk)         # aligned slice into resident RHS
    acc_ref[...] += jnp.dot(
        lhs_ref[...], rhs_ref[pl.ds(start, tk), :],
        preferred_element_type=jnp.float32,
    )

    @pl.when(k == pl.num_programs(1) - 1)
    def _epilogue():
        out = acc_ref[...] + bias_ref[...]     # bias added exactly once, in f32
        if relu:
            out = jnp.maximum(out, 0.0)
        out_ref[...] = out.astype(out_ref.dtype)


def _matmul_epilogue_fused_kernel(lhs_ref, rhs_ref, bias_ref, w2_ref,
                                  out_ref, acc_ref, *, relu):
    """out = act(lhs @ rhs + bias) @ w2.

    The second (narrow, resident) matmul is fused into the epilogue so the
    intermediate activation H never round-trips HBM (removes a full pass and
    an N x 128 write + read)."""
    k = pl.program_id(1)

    @pl.when(k == 0)
    def _init():
        acc_ref[...] = jnp.zeros_like(acc_ref)

    tk = lhs_ref.shape[1]
    start = pl.multiple_of(k * tk, tk)
    acc_ref[...] += jnp.dot(
        lhs_ref[...], rhs_ref[pl.ds(start, tk), :],
        preferred_element_type=jnp.float32,
    )

    @pl.when(k == pl.num_programs(1) - 1)
    def _epilogue():
        h = acc_ref[...] + bias_ref[...]
        if relu:
            h = jnp.maximum(h, 0.0)
        out = jnp.dot(h, w2_ref[...], preferred_element_type=jnp.float32)
        out_ref[...] = out.astype(out_ref.dtype)


def _matmul_accum_out_kernel(lhs_ref, rhs_ref, bias_ref, out_ref):
    """out (f32) = lhs @ rhs + bias, accumulated directly into the resident,
    revisited output block: no scratch, no final VPU copy/store."""
    k = pl.program_id(1)
    tk = lhs_ref.shape[1]
    start = pl.multiple_of(k * tk, tk)
    partial = jnp.dot(
        lhs_ref[...], rhs_ref[pl.ds(start, tk), :],
        preferred_element_type=jnp.float32,
    )

    @pl.when(k == 0)
    def _init():
        out_ref[...] = bias_ref[...] + partial

    @pl.when(k > 0)
    def _accum():
        out_ref[...] += partial


def gcn_matmul(lhs, rhs, bias, *, w2=None, relu=False, out_dtype=jnp.float32,
               tm=256, tk=None):
    """out = act(lhs @ rhs + bias) [@ w2]; all dims already padded to tiles.

    The narrow RHS (and bias / w2) use a constant index_map so they are DMA'd
    once and stay VMEM-resident; only the wide lhs (A_hat or X) is streamed.
    """
    M, K = lhs.shape
    K2, C = rhs.shape
    if tk is None:
        tk = K                                  # single reduction step
    assert K == K2 and M % tm == 0 and K % tk == 0 and C % 128 == 0
    assert bias.shape == (1, C)

    c_out = C if w2 is None else w2.shape[1]
    grid = (M // tm, K // tk)

    in_specs = [
        # streamed lhs tile (A_hat or X), over (rows, k)
        pl.BlockSpec((tm, tk), lambda i, k: (i, k)),
        # narrow RHS: constant block index -> fetched once, VMEM-resident
        pl.BlockSpec((K, C), lambda i, k: (0, 0)),
        # bias, resident
        pl.BlockSpec((1, C), lambda i, k: (0, 0)),
    ]
    operands = [lhs, rhs, bias]

    direct_accumulate = (w2 is None and not relu
                         and jnp.dtype(out_dtype) == jnp.dtype(jnp.float32))

    scratch_bytes = 0
    w2_bytes = 0
    if direct_accumulate:
        kernel = _matmul_accum_out_kernel
        scratch_shapes = []
    elif w2 is None:
        kernel = functools.partial(_matmul_epilogue_kernel, relu=relu)
        scratch_shapes = [pltpu.VMEM((tm, C), jnp.float32)]
        scratch_bytes = tm * C * 4
    else:
        assert w2.shape[0] == C and w2.shape[1] % 128 == 0
        in_specs.append(pl.BlockSpec(w2.shape, lambda i, k: (0, 0)))
        operands.append(w2)
        kernel = functools.partial(_matmul_epilogue_fused_kernel, relu=relu)
        scratch_shapes = [pltpu.VMEM((tm, C), jnp.float32)]
        scratch_bytes = tm * C * 4
        w2_bytes = 2 * w2.size * w2.dtype.itemsize

    # Explicit VMEM budget (default buffering: 2 copies of every input/output).
    budget = (
        2 * tm * tk * lhs.dtype.itemsize            # streamed lhs double-buffer
        + 2 * K * C * rhs.dtype.itemsize            # resident RHS
        + 2 * C * 4                                 # resident bias
        + w2_bytes                                  # resident fused W_cat
        + 2 * tm * c_out * jnp.dtype(out_dtype).itemsize   # output buffers
        + scratch_bytes                             # f32 accumulator
    )
    vmem_limit = min(64 << 20, max(16 << 20, int(1.25 * budget) + (2 << 20)))

    return pl.pallas_call(
        kernel,
        out_shape=jax.ShapeDtypeStruct((M, c_out), out_dtype),
        grid_spec=pltpu.PrefetchScalarGridSpec(
            num_scalar_prefetch=0,
            grid=grid,
            in_specs=in_specs,
            out_specs=pl.BlockSpec((tm, c_out), lambda i, k: (i, 0)),
            scratch_shapes=scratch_shapes,
        ),
        compiler_params=pltpu.CompilerParams(
            dimension_semantics=("parallel", "arbitrary"),
            vmem_limit_bytes=vmem_limit,
        ),
    )(*operands)


# ---------------------------------------------------------------------------
# Wrapper: VariationalGCNEncoder.forward
# ---------------------------------------------------------------------------
def _round_up(n, m):
    return ((n + m - 1) // m) * m


def _pad2d(x, rows, cols):
    r, c = x.shape
    return jnp.pad(x, ((0, rows - r), (0, cols - c)))


def _pick_tk(n_pad, cap):
    """Largest multiple of 256 that divides n_pad, capped at `cap` (>=256)."""
    best = 256 if n_pad % 256 == 0 else n_pad
    c = 256
    while c <= min(cap, n_pad):
        if n_pad % c == 0:
            best = c
        c += 256
    return best


def build_normalized_adjacency(edge_index, num_nodes):
    """A_hat = D^-1/2 (A + I) D^-1/2, dense, symmetric, unweighted.

    Note: duplicate edges / explicit self loops are deduplicated (.set), where
    PyG's gcn_norm would sum duplicate edge weights."""
    src, dst = edge_index[0], edge_index[1]
    a = jnp.zeros((num_nodes, num_nodes), jnp.float32)
    a = a.at[src, dst].set(1.0)
    a = a.at[dst, src].set(1.0)                      # undirected
    idx = jnp.arange(num_nodes)
    a = a.at[idx, idx].set(1.0)                      # self loops
    deg = a.sum(axis=1)
    d_inv_sqrt = jax.lax.rsqrt(deg)
    return a * d_inv_sqrt[:, None] * d_inv_sqrt[None, :]


def variational_gcn_encoder_forward(x, edge_index, params, *, tm=256, max_tk=2048):
    n, f_in = x.shape
    h_dim = params["w_h"].shape[1]
    z_dim = params["w_mu"].shape[1]

    # --- cached dense normalized adjacency (GCNConv(cached=True) semantics) --
    a_hat = build_normalized_adjacency(edge_index, n)

    # --- padded, lane-dense shapes (padding decoupled from reduction tile) ---
    n_pad = _round_up(n, tm)                 # rows padded to the row tile only
    f_pad = _round_up(f_in, 128)
    ch_pad = _round_up(h_dim, 128)           # hidden channels -> 128 lanes
    cz_pad = _round_up(2 * z_dim, 128)       # fused mu|logstd -> 128 lanes
    tk_a = _pick_tk(n_pad, max_tk)           # A_hat reduction tile (<= max_tk)

    bf16 = jnp.bfloat16
    a_hat_p = _pad2d(a_hat, n_pad, n_pad).astype(bf16)
    x_p = _pad2d(x, n_pad, f_pad).astype(bf16)

    w_h_p = _pad2d(params["w_h"], f_pad, ch_pad).astype(bf16)
    b_h_p = jnp.pad(params["b_h"], (0, ch_pad - h_dim)).reshape(1, ch_pad)
    b_h_p = b_h_p.astype(jnp.float32)

    # fused heads: W_cat = [W_mu | W_logstd] kept f32 (epilogue matmul is tiny)
    w_cat = jnp.concatenate([params["w_mu"], params["w_logstd"]], axis=1)
    b_cat = jnp.concatenate([params["b_mu"], params["b_logstd"]], axis=0)
    w_cat_p = _pad2d(w_cat, ch_pad, cz_pad).astype(jnp.float32)
    b_cat_p = jnp.pad(b_cat, (0, cz_pad - 2 * z_dim)).reshape(1, cz_pad)
    b_cat_p = b_cat_p.astype(jnp.float32)

    zero_b_h = jnp.zeros((1, ch_pad), jnp.float32)

    # --- stage 0: XW1 = X @ W_h     (tk = f_pad -> single reduction step) ----
    xw1 = gcn_matmul(x_p, w_h_p, zero_b_h, relu=False, out_dtype=bf16,
                     tm=tm, tk=f_pad)

    # --- stage 1 (+ fused 2a): HW = relu(A_hat @ XW1 + b_h) @ W_cat ----------
    hw = gcn_matmul(a_hat_p, xw1, b_h_p, w2=w_cat_p, relu=True,
                    out_dtype=bf16, tm=tm, tk=tk_a)

    # --- stage 2b: [mu | logstd] = A_hat @ HW + b_cat  (f32, accum in out) ---
    out = gcn_matmul(a_hat_p, hw, b_cat_p, relu=False, out_dtype=jnp.float32,
                     tm=tm, tk=tk_a)

    mu = out[:n, :z_dim]
    logstd = out[:n, z_dim:2 * z_dim]
    return mu, logstd


# ---------------------------------------------------------------------------
# Demo / self-check
# ---------------------------------------------------------------------------
if __name__ == "__main__":
    key = jax.random.PRNGKey(0)
    k_x, k_e1, k_e2, k_wh, k_bh, k_wm, k_bm, k_wl, k_bl = jax.random.split(key, 9)

    num_nodes, in_channels, h_dim, z_dim = 600, 192, 32, 16
    num_edges = 2400

    x = jax.random.normal(k_x, (num_nodes, in_channels), jnp.float32)
    src = jax.random.randint(k_e1, (num_edges,), 0, num_nodes)
    dst = jax.random.randint(k_e2, (num_edges,), 0, num_nodes)
    edge_index = jnp.stack([src, dst])

    params = {
        "w_h": jax.random.normal(k_wh, (in_channels, h_dim), jnp.float32)
               / jnp.sqrt(in_channels),
        "b_h": 0.1 * jax.random.normal(k_bh, (h_dim,), jnp.float32),
        "w_mu": jax.random.normal(k_wm, (h_dim, z_dim), jnp.float32)
                / jnp.sqrt(h_dim),
        "b_mu": 0.1 * jax.random.normal(k_bm, (z_dim,), jnp.float32),
        "w_logstd": jax.random.normal(k_wl, (h_dim, z_dim), jnp.float32)
                    / jnp.sqrt(h_dim),
        "b_logstd": 0.1 * jax.random.normal(k_bl, (z_dim,), jnp.float32),
    }

    # max_tk=256 keeps the small demo grid multi-step (3 row tiles x 3 k tiles)
    # so init / accumulate / epilogue paths are all exercised; production runs
    # use the default max_tk=2048 for near-roofline A_hat streaming.
    mu, logstd = variational_gcn_encoder_forward(x, edge_index, params,
                                                 tm=256, max_tk=256)
    (mu, logstd) = jax.block_until_ready((mu, logstd))

    assert mu.shape == (num_nodes, z_dim) and logstd.shape == (num_nodes, z_dim)

    # f32 reference (same dense-GCN math)
    a_hat = build_normalized_adjacency(edge_index, num_nodes)
    h_ref = jnp.maximum(a_hat @ (x @ params["w_h"]) + params["b_h"], 0.0)
    mu_ref = a_hat @ (h_ref @ params["w_mu"]) + params["b_mu"]
    ls_ref = a_hat @ (h_ref @ params["w_logstd"]) + params["b_logstd"]

    err_mu = float(jnp.max(jnp.abs(mu - mu_ref)))
    err_ls = float(jnp.max(jnp.abs(logstd - ls_ref)))
    if not (err_mu < 0.1 and err_ls < 0.1):   # generous: bf16 operands, f32 accum
        raise RuntimeError(f"mismatch vs reference: mu {err_mu}, logstd {err_ls}")

    print("KERNEL_OK")
</pallas_src>

<mosaic_0001>
module attributes {stable_mosaic.version = 11 : i64} {
  func.func @_matmul_epilogue_kernel(%arg0: i32, %arg1: i32, %arg2: memref<256x256xbf16, #tpu.memory_space<vmem>>, %arg3: memref<256x128xbf16, #tpu.memory_space<vmem>>, %arg4: memref<1x128xf32, #tpu.memory_space<vmem>>, %arg5: memref<256x128xbf16, #tpu.memory_space<vmem>>, %arg6: memref<256x128xf32, #tpu.memory_space<vmem>>) attributes {dimension_semantics = [#tpu.dimension_semantics<parallel>, #tpu.dimension_semantics<arbitrary>], iteration_bounds = array<i64: 3, 1>, scalar_prefetch = 0 : i64, scratch_operands = 1 : i64, tpu.core_type = #tpu.core_type<tc>, window_params = [{transform_indices = @transform_0, window_bounds = array<i64: 256, 256>}, {pipeline_mode = #tpu.pipeline_mode<synchronous>, transform_indices = @transform_1, window_bounds = array<i64: 256, 128>}, {pipeline_mode = #tpu.pipeline_mode<synchronous>, transform_indices = @transform_2, window_bounds = array<i64: 1, 128>}, {transform_indices = @transform_3, window_bounds = array<i64: 256, 128>}]} {
    %c0_i32 = arith.constant 0 : i32
    %0 = arith.cmpi eq, %arg1, %c0_i32 : i32
    %1 = arith.extui %0 : i1 to i32
    %c0_i32_0 = arith.constant 0 : i32
    %2 = arith.cmpi ne, %1, %c0_i32_0 : i32
    scf.if %2 {
      %cst_9 = arith.constant 0.000000e+00 : f32
      %15 = vector.broadcast %cst_9 : f32 to vector<256x128xf32>
      %c0_10 = arith.constant 0 : index
      %c0_11 = arith.constant 0 : index
      %16 = vector.load %arg6[%c0_10, %c0_11] : memref<256x128xf32, #tpu.memory_space<vmem>>, vector<256x128xf32>
      tpu.vector_store %arg6[%c0_10, %c0_11], %15 {strides = array<i32>} : memref<256x128xf32, #tpu.memory_space<vmem>>, vector<256x128xf32>,
    } else {
    }
    %c256_i32 = arith.constant 256 : i32
    %3 = arith.muli %arg1, %c256_i32 : i32
    %4 = tpu.assume_multiple %3, 256 : i32
    %c0 = arith.constant 0 : index
    %c0_1 = arith.constant 0 : index
    %5 = vector.load %arg6[%c0, %c0_1] : memref<256x128xf32, #tpu.memory_space<vmem>>, vector<256x128xf32>
    %c0_2 = arith.constant 0 : index
    %c0_3 = arith.constant 0 : index
    %6 = vector.load %arg2[%c0_2, %c0_3] : memref<256x256xbf16, #tpu.memory_space<vmem>>, vector<256x256xbf16>
    %7 = arith.index_cast %4 : i32 to index
    %c0_4 = arith.constant 0 : index
    %8 = vector.load %arg3[%7, %c0_4] : memref<256x128xbf16, #tpu.memory_space<vmem>>, vector<256x128xbf16>
    %cst = arith.constant dense<0.000000e+00> : vector<256x128xf32>
    %9 = tpu.matmul %6, %8, %cst {dimension_numbers = #tpu.dot_dimension_numbers<[1], [0], [0], [1], [0, 0, 1, 1], [], []>} : vector<256x256xbf16>, vector<256x128xbf16>, vector<256x128xf32> -> vector<256x128xf32>
    %10 = arith.addf %5, %9 : vector<256x128xf32>
    %c0_5 = arith.constant 0 : index
    %c0_6 = arith.constant 0 : index
    %11 = vector.load %arg6[%c0_5, %c0_6] : memref<256x128xf32, #tpu.memory_space<vmem>>, vector<256x128xf32>
    tpu.vector_store %arg6[%c0_5, %c0_6], %10 {strides = array<i32>} : memref<256x128xf32, #tpu.memory_space<vmem>>, vector<256x128xf32>,
    %c0_i32_7 = arith.constant 0 : i32
    %12 = arith.cmpi eq, %arg1, %c0_i32_7 : i32
    %13 = arith.extui %12 : i1 to i32
    %c0_i32_8 = arith.constant 0 : i32
    %14 = arith.cmpi ne, %13, %c0_i32_8 : i32
    scf.if %14 {
      %c0_9 = arith.constant 0 : index
      %c0_10 = arith.constant 0 : index
      %15 = vector.load %arg6[%c0_9, %c0_10] : memref<256x128xf32, #tpu.memory_space<vmem>>, vector<256x128xf32>
      %c0_11 = arith.constant 0 : index
      %c0_12 = arith.constant 0 : index
      %16 = vector.load %arg4[%c0_11, %c0_12] : memref<1x128xf32, #tpu.memory_space<vmem>>, vector<1x128xf32>
      %17 = vector.broadcast %16 : vector<1x128xf32> to vector<256x128xf32>
      %18 = arith.addf %15, %17 : vector<256x128xf32>
      %19 = arith.truncf %18 : vector<256x128xf32> to vector<256x128xbf16>
      %c0_13 = arith.constant 0 : index
      %c0_14 = arith.constant 0 : index
      %20 = vector.load %arg5[%c0_13, %c0_14] : memref<256x128xbf16, #tpu.memory_space<vmem>>, vector<256x128xbf16>
      tpu.vector_store %arg5[%c0_13, %c0_14], %19 {strides = array<i32>} : memref<256x128xbf16, #tpu.memory_space<vmem>>, vector<256x128xbf16>,
    } else {
    }
    return
  }
  func.func @transform_0(%arg0: i32, %arg1: i32) -> (i32, i32) {
    %c0_i32 = arith.constant 0 : i32
    return %arg0, %arg1 : i32, i32
  }
  func.func @transform_1(%arg0: i32, %arg1: i32) -> (i32, i32) {
    %c0_i32 = arith.constant 0 : i32
    %c0_i32_0 = arith.constant 0 : i32
    %c0_i32_1 = arith.constant 0 : i32
    return %c0_i32, %c0_i32_0 : i32, i32
  }
  func.func @transform_2(%arg0: i32, %arg1: i32) -> (i32, i32) {
    %c0_i32 = arith.constant 0 : i32
    %c0_i32_0 = arith.constant 0 : i32
    %c0_i32_1 = arith.constant 0 : i32
    return %c0_i32, %c0_i32_0 : i32, i32
  }
  func.func @transform_3(%arg0: i32, %arg1: i32) -> (i32, i32) {
    %c0_i32 = arith.constant 0 : i32
    %c0_i32_0 = arith.constant 0 : i32
    return %arg0, %c0_i32 : i32, i32
  }
}

</mosaic_0001>

<llo_original>
// kernel: tpu_custom_call.1
$region0: #{tpu_custom_call.1}
  #allocation0 [shape = 'u32[]', space=smem, size = 0x4, offset = 0x4, fixed_abs, tag = 'smem constant byte address 0x4 - core index']
  #allocation1 [shape = 'u32[144,128]{1,0:T(1,128)}', space=vmem, size = 0x12000, scoped, tag = 'internal scratch']
  #allocation2 [shape = 'f32[256,128]{1,0:T(8,128)}', space=vmem, size = 0x20000, scoped, tag = 'scratch operand']
  %s0 = inlined_call_operand.hbm [shape: bf16[768,256], index: 0, kind: input, shape index: {}]
  %s1 = inlined_call_operand.hbm [shape: bf16[256,128], index: 1, kind: input, shape index: {}]
  %s2 = inlined_call_operand.vmem [shape: f32[1,128], index: 2, kind: input, shape index: {}]
  %s3 = inlined_call_operand.hbm [shape: bf16[768,128], index: 3, kind: output, shape index: {}]
  %s4 = sld [smem:[#allocation0]]
  $region61: #{tpu_custom_call.1} parent=0
    _
  %s6 = ssub.s32 1, %s4
  %s7 = scalar_select 0, %s6, %s4
  $region1: #{tpu_custom_call.1} parent=0
    #allocation3 [shape = 'u8[262144]{0}', space=vmem, size = 0x40000, scoped, tag = 'input window, operand 0']
    #allocation4 [shape = 's32[2]{0}', space=sflag, size = 0x8, scoped, tag = 'scoped memory for tpu_custom_call.1']
    #allocation5 [shape = 's32[2]{0}', space=sflag, size = 0x8, scoped, tag = 'scoped memory for tpu_custom_call.1']
    #allocation6 [shape = 'u8[65536]{0}', space=vmem, size = 0x10000, scoped, tag = 'input window, operand 1, single buffered']
    #allocation7 [shape = 's32[1]{0}', space=sflag, size = 0x4, scoped, tag = 'scoped memory for tpu_custom_call.1']
    #allocation8 [shape = 'u8[131072]{0}', space=vmem, size = 0x20000, scoped, tag = 'output window, operand 0']
    %8 = vsyncpa [#allocation4], 0
    %s9 = scalar_lea.sflag [#allocation4], 1
    %10 = vsyncpa %s9, 0
    %11 = vsyncpa [#allocation7], 0
    %12 = vsyncpa [#allocation5], 0
    %s13 = scalar_lea.sflag [#allocation5], 1
    %14 = vsyncpa %s13, 0
    loop: start=0, step=1, limit=5
    $region2: #{tpu_custom_call.1} parent=1 // loop_pre_header
      _
    $region3: #{tpu_custom_call.1} parent=1 // loop_header
      %s16 = sphi 0, %s20
      %p17 = scmp.ge.s32.totalorder %s16, 5
      %s23 = sphi 0, %s35
      %s24 = sphi 0, %s31
      %s25 = sphi 0, %s23
      %s26 = sphi 0, %s24
      %s27 = sphi 0, %s25
      %s28 = sphi 0, %s26
      %s40 = sphi 0, %s42
      %s43 = sphi 0, %s40
      %s44 = sphi 0, %s43
      %s60 = sphi 0, %s44
      %s64 = sphi 0, %s64
      %s66 = sphi 0, %s64
      %s67 = sphi 0, %s66
      %s81 = sphi 0, %s67
      %s85 = sphi 0, %s85
      %s87 = sphi 0, %s85
      %s88 = sphi 0, %s87
      %s102 = sphi 0, %s88
      %s108 = sphi 0, %s110
      %s111 = sphi 0, %s108
      %s112 = sphi 0, %s111
      %s128 = sphi 0, %s112
    $region4: #{tpu_custom_call.1} parent=1 // loop_header_branch
      %19 = sbr.rel (%p17) target = $region8
    $region5: #{tpu_custom_call.1} parent=1 // loop_body
      %s21 = ssub.s32 %s16, 1
      %s22 = ssub.s32 %s16, 2
      %s29 = sadd.s32 1, %s24
      %p30 = scmp.ge.s32.totalorder %s29, 1
      %s31 = scalar_select %p30, 0, %s29
      %s32 = sadd.s32 1, %s23
      %s33 = scalar_select %p30, %s32, %s23
      %p34 = scmp.ge.s32.totalorder %s33, 3
      %s35 = scalar_select %p34, 0, %s33
      %s36 = ssub.s32 %s23, %s35
      %s37 = ssub.s32 %s24, %s31
      %s38 = sor.u32 %s36, %s37
      %p39 = scmp.eq.s32.totalorder %s38, 0
      %s41 = sadd.s32 %s40, 1
      %s42 = scalar_select %p39, %s40, %s41
      %p45 = pneg %p39
      %p46 = scmp.eq.s32.totalorder %s16, 2
      %p47 = por %p45, %p46
      %p48 = scmp.ne.s32.totalorder %s40, %s43
      %p49 = scmp.eq.s32.totalorder %s16, 0
      %p50 = por %p48, %p49
      %p51 = scmp.ne.s32.totalorder %s40, %s43
      %p52 = scmp.eq.s32.totalorder %s21, 2
      %p53 = por %p51, %p52
      %p54 = scmp.ne.s32.totalorder %s43, %s44
      %p55 = scmp.eq.s32.totalorder %s21, 0
      %p56 = por %p54, %p55
      %p57 = scmp.ne.s32.totalorder %s43, %s44
      %p58 = scmp.eq.s32.totalorder %s22, 2
      %p59 = por %p57, %p58
      %p61 = scmp.ne.s32.totalorder %s44, %s60
      %p62 = scmp.eq.s32.totalorder %s22, 0
      %p63 = por %p61, %p62
      %s65 = sadd.s32 %s64, 1
      %p68 = scmp.eq.s32.totalorder %s16, 2
      %p69 = scmp.ne.s32.totalorder %s64, %s66
      %p70 = scmp.eq.s32.totalorder %s16, 0
      %p71 = por %p69, %p70
      %p72 = scmp.ne.s32.totalorder %s64, %s66
      %p73 = scmp.eq.s32.totalorder %s21, 2
      %p74 = por %p72, %p73
      %p75 = scmp.ne.s32.totalorder %s66, %s67
      %p76 = scmp.eq.s32.totalorder %s21, 0
      %p77 = por %p75, %p76
      %p78 = scmp.ne.s32.totalorder %s66, %s67
      %p79 = scmp.eq.s32.totalorder %s22, 2
      %p80 = por %p78, %p79
      %p82 = scmp.ne.s32.totalorder %s67, %s81
      %p83 = scmp.eq.s32.totalorder %s22, 0
      %p84 = por %p82, %p83
      %s86 = sadd.s32 %s85, 1
      %p89 = scmp.eq.s32.totalorder %s16, 2
      %p90 = scmp.ne.s32.totalorder %s85, %s87
      %p91 = scmp.eq.s32.totalorder %s16, 0
      %p92 = por %p90, %p91
      %p93 = scmp.ne.s32.totalorder %s85, %s87
      %p94 = scmp.eq.s32.totalorder %s21, 2
      %p95 = por %p93, %p94
      %p96 = scmp.ne.s32.totalorder %s87, %s88
      %p97 = scmp.eq.s32.totalorder %s21, 0
      %p98 = por %p96, %p97
      %p99 = scmp.ne.s32.totalorder %s87, %s88
      %p100 = scmp.eq.s32.totalorder %s22, 2
      %p101 = por %p99, %p100
      %p103 = scmp.ne.s32.totalorder %s88, %s102
      %p104 = scmp.eq.s32.totalorder %s22, 0
      %p105 = por %p103, %p104
      %s106 = ssub.s32 %s23, %s35
      %p107 = scmp.eq.s32.totalorder %s106, 0
      %s109 = sadd.s32 %s108, 1
      %s110 = scalar_select %p107, %s108, %s109
      %p113 = pneg %p107
      %p114 = scmp.eq.s32.totalorder %s16, 2
      %p115 = por %p113, %p114
      %p116 = scmp.ne.s32.totalorder %s108, %s111
      %p117 = scmp.eq.s32.totalorder %s16, 0
      %p118 = por %p116, %p117
      %p119 = scmp.ne.s32.totalorder %s108, %s111
      %p120 = scmp.eq.s32.totalorder %s21, 2
      %p121 = por %p119, %p120
      %p122 = scmp.ne.s32.totalorder %s111, %s112
      %p123 = scmp.eq.s32.totalorder %s21, 0
      %p124 = por %p122, %p123
      %p125 = scmp.ne.s32.totalorder %s111, %s112
      %p126 = scmp.eq.s32.totalorder %s22, 2
      %p127 = por %p125, %p126
      %p129 = scmp.ne.s32.totalorder %s112, %s128
      %p130 = scmp.eq.s32.totalorder %s22, 0
      %p131 = por %p129, %p130
      %p132 = scmp.le.s32.totalorder 1, %s16
      %p133 = scmp.lt.s32.totalorder %s16, 4
      %p134 = pnand %p132, %p133
      %p135 = pneg %p134
      // Predicated region
      $region9: #{tpu_custom_call.1} parent=5 // pred_check
        _
      $region10: #{tpu_custom_call.1} parent=5 // pred_check_branch
        %137 = sbr.rel (%p134) target = $region12
      $region11: #{tpu_custom_call.1} parent=5 // pred_region
        %s138 = ssub.s32 %s16, 1
        // Predicated region
        $region13: #{tpu_custom_call.1} parent=11 // pred_check
          %p139 = pneg %p77
        $region14: #{tpu_custom_call.1} parent=11 // pred_check_branch
          %141 = sbr.rel (%p139) target = $region16
        $region15: #{tpu_custom_call.1} parent=11 // pred_region
          %s143 = ssub.s32 2048, 2048
          %144 = vsyncadd [#allocation7], %s143
          %s145 = sshll.u32 [#allocation6], 4
          %s146 = int_to_ptr.vmem [resolvable:$true] %s145
          %151 = dma.hbm_to_vmem [thread:$0]  %s1, 2048, %s146, [#allocation7], 64, 64, 4
        $region16: #{tpu_custom_call.1} parent=11 // pred_fallthru
          _
        // Predicated region
        $region17: #{tpu_custom_call.1} parent=11 // pred_check
          %p152 = pneg %p98
        $region18: #{tpu_custom_call.1} parent=11 // pred_check_branch
          %154 = sbr.rel (%p152) target = $region20
        $region19: #{tpu_custom_call.1} parent=11 // pred_region
          _
        $region20: #{tpu_custom_call.1} parent=11 // pred_fallthru
          _
      $region12: #{tpu_custom_call.1} parent=5 // pred_fallthru
        _
      %p155 = scmp.lt.s32.totalorder %s16, 3
      // Predicated region
      $region21: #{tpu_custom_call.1} parent=5 // pred_check
        %p156 = pneg %p155
      $region22: #{tpu_custom_call.1} parent=5 // pred_check_branch
        %158 = sbr.rel (%p156) target = $region24
      $region23: #{tpu_custom_call.1} parent=5 // pred_region
        // Predicated region
        $region25: #{tpu_custom_call.1} parent=23 // pred_check
          %p159 = pneg %p50
        $region26: #{tpu_custom_call.1} parent=23 // pred_check_branch
          %161 = sbr.rel (%p159) target = $region28
        $region27: #{tpu_custom_call.1} parent=23 // pred_region
          %s162 = sand.u32 %s40, 1
          %s163 = scalar_lea.sflag [#allocation4], %s162
          %s164 = sand.u32 %s40, 1
          %s165 = smul.addr %s164, 256
          %s166 = scalar_lea.vmem [#allocation3], %s165
          %s167 = smul.u32 32, %s23
          %s168 = smul.u32 2, %s24
          %s170 = ssub.s32 4096, 4096
          %171 = vsyncadd %s163, %s170
          %s172 = smul.addr %s167, 2
          %s173 = sadd.s32 %s168, %s172
          %s174 = smul.addr %s173, 64
          %s175 = scalar_lea.hbm %s0, %s174
          %s176 = sshll.u32 %s166, 4
          %s177 = int_to_ptr.vmem [resolvable:$true] %s176
          %182 = dma.hbm_to_vmem [thread:$0]  %s175, 4096, %s177, %s163, 128, 128, 8
        $region28: #{tpu_custom_call.1} parent=23 // pred_fallthru
          _
      $region24: #{tpu_custom_call.1} parent=5 // pred_fallthru
        _
      %p183 = scmp.le.s32.totalorder 1, %s16
      %p184 = scmp.lt.s32.totalorder %s16, 4
      %p185 = pnand %p183, %p184
      %p186 = pneg %p185
      // Predicated region
      $region29: #{tpu_custom_call.1} parent=5 // pred_check
        _
      $region30: #{tpu_custom_call.1} parent=5 // pred_check_branch
        %188 = sbr.rel (%p185) target = $region32
      $region31: #{tpu_custom_call.1} parent=5 // pred_region
        %s189 = ssub.s32 %s16, 1
        %s190 = sand.u32 %s43, 1
        %s191 = scalar_lea.sflag [#allocation4], %s190
        %s192 = sand.u32 %s43, 1
        %s193 = smul.addr %s192, 256
        %s194 = scalar_lea.vmem [#allocation3], %s193
        // Predicated region
        $region33: #{tpu_custom_call.1} parent=31 // pred_check
          %p195 = pneg %p56
        $region34: #{tpu_custom_call.1} parent=31 // pred_check_branch
          %197 = sbr.rel (%p195) target = $region36
        $region35: #{tpu_custom_call.1} parent=31 // pred_region
          %198 = dma.done %s191, 4096
        $region36: #{tpu_custom_call.1} parent=31 // pred_fallthru
          _
        // Predicated region
        $region37: #{tpu_custom_call.1} parent=31 // pred_check
          %p199 = pneg %p77
        $region38: #{tpu_custom_call.1} parent=31 // pred_check_branch
          %201 = sbr.rel (%p199) target = $region40
        $region39: #{tpu_custom_call.1} parent=31 // pred_region
          %202 = dma.done [#allocation7], 2048
        $region40: #{tpu_custom_call.1} parent=31 // pred_fallthru
          _
        %s203 = sand.u32 %s43, 1
        %s204 = scalar_lea.sflag [#allocation4], %s203
        %s205 = sand.u32 %s43, 1
        %s206 = smul.addr %s205, 256
        %s207 = scalar_lea.vmem [#allocation3], %s206
        %p208 = pneg %p56
        %p209 = pneg %p53
        %p210 = pneg %p77
        %p211 = pneg %p74
        %p212 = pneg %p98
        %p213 = pneg %p95
        %p214 = pneg %p124
        %p215 = pneg %p121
        %s216 = sand.u32 %s111, 1
        %s217 = scalar_lea.sflag [#allocation5], %s216
        %s218 = sand.u32 %s111, 1
        %s219 = smul.addr %s218, 128
        %s220 = scalar_lea.vmem [#allocation8], %s219
        %s221 = smul.u32 32, %s25
        %s222 = smul.u32 2, %s26
        %s223 = smul.u32 32, %s25
        %p225 = scmp.eq.s32.totalorder %s26, 0
        // Predicated region
        $region41: #{tpu_custom_call.1} parent=31 // pred_check
          %p226 = pneg %p225
        $region42: #{tpu_custom_call.1} parent=31 // pred_check_branch
          %228 = sbr.rel (%p226) target = $region44
        $region43: #{tpu_custom_call.1} parent=31 // pred_region
          %229 = vst [vmem:[#allocation2] sm:$0xff] 0.0
          %230 = vst [vmem:[#allocation2 + $0x8] sm:$0xff] 0.0
          %231 = vst [vmem:[#allocation2 + $0x10] sm:$0xff] 0.0
          %232 = vst [vmem:[#allocation2 + $0x18] sm:$0xff] 0.0
          %233 = vst [vmem:[#allocation2 + $0x20] sm:$0xff] 0.0
          %234 = vst [vmem:[#allocation2 + $0x28] sm:$0xff] 0.0
          %235 = vst [vmem:[#allocation2 + $0x30] sm:$0xff] 0.0
          %236 = vst [vmem:[#allocation2 + $0x38] sm:$0xff] 0.0
          %237 = vst [vmem:[#allocation2 + $0x40] sm:$0xff] 0.0
          %238 = vst [vmem:[#allocation2 + $0x48] sm:$0xff] 0.0
          %239 = vst [vmem:[#allocation2 + $0x50] sm:$0xff] 0.0
          %240 = vst [vmem:[#allocation2 + $0x58] sm:$0xff] 0.0
          %241 = vst [vmem:[#allocation2 + $0x60] sm:$0xff] 0.0
          %242 = vst [vmem:[#allocation2 + $0x68] sm:$0xff] 0.0
          %243 = vst [vmem:[#allocation2 + $0x70] sm:$0xff] 0.0
          %244 = vst [vmem:[#allocation2 + $0x78] sm:$0xff] 0.0
          %245 = vst [vmem:[#allocation2 + $0x80] sm:$0xff] 0.0
          %246 = vst [vmem:[#allocation2 + $0x88] sm:$0xff] 0.0
          %247 = vst [vmem:[#allocation2 + $0x90] sm:$0xff] 0.0
          %248 = vst [vmem:[#allocation2 + $0x98] sm:$0xff] 0.0
          %249 = vst [vmem:[#allocation2 + $0xa0] sm:$0xff] 0.0
          %250 = vst [vmem:[#allocation2 + $0xa8] sm:$0xff] 0.0
          %251 = vst [vmem:[#allocation2 + $0xb0] sm:$0xff] 0.0
          %252 = vst [vmem:[#allocation2 + $0xb8] sm:$0xff] 0.0
          %253 = vst [vmem:[#allocation2 + $0xc0] sm:$0xff] 0.0
          %254 = vst [vmem:[#allocation2 + $0xc8] sm:$0xff] 0.0
          %255 = vst [vmem:[#allocation2 + $0xd0] sm:$0xff] 0.0
          %256 = vst [vmem:[#allocation2 + $0xd8] sm:$0xff] 0.0
          %257 = vst [vmem:[#allocation2 + $0xe0] sm:$0xff] 0.0
          %258 = vst [vmem:[#allocation2 + $0xe8] sm:$0xff] 0.0
          %259 = vst [vmem:[#allocation2 + $0xf0] sm:$0xff] 0.0
          %260 = vst [vmem:[#allocation2 + $0xf8] sm:$0xff] 0.0
        $region44: #{tpu_custom_call.1} parent=31 // pred_fallthru
          _
        %s261 = smul.u32 %s26, 256
        %v262 = vld [vmem:[#allocation2] sm:$0xff]
        %v263 = vld [vmem:[#allocation2 + $0x8] sm:$0xff]
        %v264 = vld [vmem:[#allocation2 + $0x10] sm:$0xff]
        %v265 = vld [vmem:[#allocation2 + $0x18] sm:$0xff]
        %v266 = vld [vmem:[#allocation2 + $0x20] sm:$0xff]
        %v267 = vld [vmem:[#allocation2 + $0x28] sm:$0xff]
        %v268 = vld [vmem:[#allocation2 + $0x30] sm:$0xff]
        %v269 = vld [vmem:[#allocation2 + $0x38] sm:$0xff]
        %v270 = vld [vmem:[#allocation2 + $0x40] sm:$0xff]
        %v271 = vld [vmem:[#allocation2 + $0x48] sm:$0xff]
        %v272 = vld [vmem:[#allocation2 + $0x50] sm:$0xff]
        %v273 = vld [vmem:[#allocation2 + $0x58] sm:$0xff]
        %v274 = vld [vmem:[#allocation2 + $0x60] sm:$0xff]
        %v275 = vld [vmem:[#allocation2 + $0x68] sm:$0xff]
        %v276 = vld [vmem:[#allocation2 + $0x70] sm:$0xff]
        %v277 = vld [vmem:[#allocation2 + $0x78] sm:$0xff]
        %v278 = vld [vmem:[#allocation2 + $0x80] sm:$0xff]
        %v279 = vld [vmem:[#allocation2 + $0x88] sm:$0xff]
        %v280 = vld [vmem:[#allocation2 + $0x90] sm:$0xff]
        %v281 = vld [vmem:[#allocation2 + $0x98] sm:$0xff]
        %v282 = vld [vmem:[#allocation2 + $0xa0] sm:$0xff]
        %v283 = vld [vmem:[#allocation2 + $0xa8] sm:$0xff]
        %v284 = vld [vmem:[#allocation2 + $0xb0] sm:$0xff]
        %v285 = vld [vmem:[#allocation2 + $0xb8] sm:$0xff]
        %v286 = vld [vmem:[#allocation2 + $0xc0] sm:$0xff]
        %v287 = vld [vmem:[#allocation2 + $0xc8] sm:$0xff]
        %v288 = vld [vmem:[#allocation2 + $0xd0] sm:$0xff]
        %v289 = vld [vmem:[#allocation2 + $0xd8] sm:$0xff]
        %v290 = vld [vmem:[#allocation2 + $0xe0] sm:$0xff]
        %v291 = vld [vmem:[#allocation2 + $0xe8] sm:$0xff]
        %v292 = vld [vmem:[#allocation2 + $0xf0] sm:$0xff]
        %v293 = vld [vmem:[#allocation2 + $0xf8] sm:$0xff]
        %v294 = vld [vmem:[%s194] sm:$0xff]
        %v295 = vld [vmem:[%s194 + $0x8] sm:$0xff]
        %v296 = vld [vmem:[%s194 + $0x10] sm:$0xff]
        %v297 = vld [vmem:[%s194 + $0x18] sm:$0xff]
        %v298 = vld [vmem:[%s194 + $0x20] sm:$0xff]
        %v299 = vld [vmem:[%s194 + $0x28] sm:$0xff]
        %v300 = vld [vmem:[%s194 + $0x30] sm:$0xff]
        %v301 = vld [vmem:[%s194 + $0x38] sm:$0xff]
        %v302 = vld [vmem:[%s194 + $0x40] sm:$0xff]
        %v303 = vld [vmem:[%s194 + $0x48] sm:$0xff]
        %v304 = vld [vmem:[%s194 + $0x50] sm:$0xff]
        %v305 = vld [vmem:[%s194 + $0x58] sm:$0xff]
        %v306 = vld [vmem:[%s194 + $0x60] sm:$0xff]
        %v307 = vld [vmem:[%s194 + $0x68] sm:$0xff]
        %v308 = vld [vmem:[%s194 + $0x70] sm:$0xff]
        %v309 = vld [vmem:[%s194 + $0x78] sm:$0xff]
        %v310 = vld [vmem:[%s194 + $0x80] sm:$0xff]
        %v311 = vld [vmem:[%s194 + $0x88] sm:$0xff]
        %v312 = vld [vmem:[%s194 + $0x90] sm:$0xff]
        %v313 = vld [vmem:[%s194 + $0x98] sm:$0xff]
        %v314 = vld [vmem:[%s194 + $0xa0] sm:$0xff]
        %v315 = vld [vmem:[%s194 + $0xa8] sm:$0xff]
        %v316 = vld [vmem:[%s194 + $0xb0] sm:$0xff]
        %v317 = vld [vmem:[%s194 + $0xb8] sm:$0xff]
        %v318 = vld [vmem:[%s194 + $0xc0] sm:$0xff]
        %v319 = vld [vmem:[%s194 + $0xc8] sm:$0xff]
        %v320 = vld [vmem:[%s194 + $0xd0] sm:$0xff]
        %v321 = vld [vmem:[%s194 + $0xd8] sm:$0xff]
        %v322 = vld [vmem:[%s194 + $0xe0] sm:$0xff]
        %v323 = vld [vmem:[%s194 + $0xe8] sm:$0xff]
        %v324 = vld [vmem:[%s194 + $0xf0] sm:$0xff]
        %v325 = vld [vmem:[%s194 + $0xf8] sm:$0xff]
        %s326 = sshra.s32 %s261, 3
        %s327 = sand.u32 %s261, 7
        %s328 = smul.addr %s326, 4
        %s329 = scalar_lea.vmem [#allocation6], %s328
        %v330 = vld [vmem:[%s329] sm:$0xf]
        %v331 = vld [vmem:[%s329 + $0x4] sm:$0xf]
        %v332 = vld [vmem:[%s329 + $0x8] sm:$0xf]
        %v333 = vld [vmem:[%s329 + $0xc] sm:$0xf]
        %v334 = vld [vmem:[%s329 + $0x10] sm:$0xf]
        %v335 = vld [vmem:[%s329 + $0x14] sm:$0xf]
        %v336 = vld [vmem:[%s329 + $0x18] sm:$0xf]
        %v337 = vld [vmem:[%s329 + $0x1c] sm:$0xf]
        %v338 = vld [vmem:[%s329 + $0x20] sm:$0xf]
        %v339 = vld [vmem:[%s329 + $0x24] sm:$0xf]
        %v340 = vld [vmem:[%s329 + $0x28] sm:$0xf]
        %v341 = vld [vmem:[%s329 + $0x2c] sm:$0xf]
        %v342 = vld [vmem:[%s329 + $0x30] sm:$0xf]
        %v343 = vld [vmem:[%s329 + $0x34] sm:$0xf]
        %v344 = vld [vmem:[%s329 + $0x38] sm:$0xf]
        %v345 = vld [vmem:[%s329 + $0x3c] sm:$0xf]
        %v346 = vld [vmem:[%s329 + $0x40] sm:$0xf]
        %v347 = vld [vmem:[%s329 + $0x44] sm:$0xf]
        %v348 = vld [vmem:[%s329 + $0x48] sm:$0xf]
        %v349 = vld [vmem:[%s329 + $0x4c] sm:$0xf]
        %v350 = vld [vmem:[%s329 + $0x50] sm:$0xf]
        %v351 = vld [vmem:[%s329 + $0x54] sm:$0xf]
        %v352 = vld [vmem:[%s329 + $0x58] sm:$0xf]
        %v353 = vld [vmem:[%s329 + $0x5c] sm:$0xf]
        %v354 = vld [vmem:[%s329 + $0x60] sm:$0xf]
        %v355 = vld [vmem:[%s329 + $0x64] sm:$0xf]
        %v356 = vld [vmem:[%s329 + $0x68] sm:$0xf]
        %v357 = vld [vmem:[%s329 + $0x6c] sm:$0xf]
        %v358 = vld [vmem:[%s329 + $0x70] sm:$0xf]
        %v359 = vld [vmem:[%s329 + $0x74] sm:$0xf]
        %v360 = vld [vmem:[%s329 + $0x78] sm:$0xf]
        %v361 = vld [vmem:[%s329 + $0x7c] sm:$0xf]
        %v394 = vunpack.c.l.b16 %v294
        %v395 = vunpack.c.h.b16 %v294
        %v396 = vunpack.c.l.b16 %v295
        %v397 = vunpack.c.h.b16 %v295
        %v398 = vunpack.c.l.b16 %v296
        %v399 = vunpack.c.h.b16 %v296
        %v400 = vunpack.c.l.b16 %v297
        %v401 = vunpack.c.h.b16 %v297
        %v402 = vunpack.c.l.b16 %v298
        %v403 = vunpack.c.h.b16 %v298
        %v404 = vunpack.c.l.b16 %v299
        %v405 = vunpack.c.h.b16 %v299
        %v406 = vunpack.c.l.b16 %v300
        %v407 = vunpack.c.h.b16 %v300
        %v408 = vunpack.c.l.b16 %v301
        %v409 = vunpack.c.h.b16 %v301
        %v410 = vunpack.c.l.b16 %v302
        %v411 = vunpack.c.h.b16 %v302
        %v412 = vunpack.c.l.b16 %v303
        %v413 = vunpack.c.h.b16 %v303
        %v414 = vunpack.c.l.b16 %v304
        %v415 = vunpack.c.h.b16 %v304
        %v416 = vunpack.c.l.b16 %v305
        %v417 = vunpack.c.h.b16 %v305
        %v418 = vunpack.c.l.b16 %v306
        %v419 = vunpack.c.h.b16 %v306
        %v420 = vunpack.c.l.b16 %v307
        %v421 = vunpack.c.h.b16 %v307
        %v422 = vunpack.c.l.b16 %v308
        %v423 = vunpack.c.h.b16 %v308
        %v424 = vunpack.c.l.b16 %v309
        %v425 = vunpack.c.h.b16 %v309
        %v426 = vunpack.c.l.b16 %v310
        %v427 = vunpack.c.h.b16 %v310
        %v428 = vunpack.c.l.b16 %v311
        %v429 = vunpack.c.h.b16 %v311
        %v430 = vunpack.c.l.b16 %v312
        %v431 = vunpack.c.h.b16 %v312
        %v432 = vunpack.c.l.b16 %v313
        %v433 = vunpack.c.h.b16 %v313
        %v434 = vunpack.c.l.b16 %v314
        %v435 = vunpack.c.h.b16 %v314
        %v436 = vunpack.c.l.b16 %v315
        %v437 = vunpack.c.h.b16 %v315
        %v438 = vunpack.c.l.b16 %v316
        %v439 = vunpack.c.h.b16 %v316
        %v440 = vunpack.c.l.b16 %v317
        %v441 = vunpack.c.h.b16 %v317
        %v442 = vunpack.c.l.b16 %v318
        %v443 = vunpack.c.h.b16 %v318
        %v444 = vunpack.c.l.b16 %v319
        %v445 = vunpack.c.h.b16 %v319
        %v446 = vunpack.c.l.b16 %v320
        %v447 = vunpack.c.h.b16 %v320
        %v448 = vunpack.c.l.b16 %v321
        %v449 = vunpack.c.h.b16 %v321
        %v450 = vunpack.c.l.b16 %v322
        %v451 = vunpack.c.h.b16 %v322
        %v452 = vunpack.c.l.b16 %v323
        %v453 = vunpack.c.h.b16 %v323
        %v454 = vunpack.c.l.b16 %v324
        %v455 = vunpack.c.h.b16 %v324
        %v456 = vunpack.c.l.b16 %v325
        %v457 = vunpack.c.h.b16 %v325
        %v458 = vpack.c.b16 %v396, %v394
        %v459 = vpack.c.b16 %v397, %v395
        %v460 = vpack.c.b16 %v400, %v398
        %v461 = vpack.c.b16 %v401, %v399
        %v462 = vpack.c.b16 %v404, %v402
        %v463 = vpack.c.b16 %v405, %v403
        %v464 = vpack.c.b16 %v408, %v406
        %v465 = vpack.c.b16 %v409, %v407
        %v466 = vpack.c.b16 %v412, %v410
        %v467 = vpack.c.b16 %v413, %v411
        %v468 = vpack.c.b16 %v416, %v414
        %v469 = vpack.c.b16 %v417, %v415
        %v470 = vpack.c.b16 %v420, %v418
        %v471 = vpack.c.b16 %v421, %v419
        %v472 = vpack.c.b16 %v424, %v422
        %v473 = vpack.c.b16 %v425, %v423
        %v474 = vpack.c.b16 %v428, %v426
        %v475 = vpack.c.b16 %v429, %v427
        %v476 = vpack.c.b16 %v432, %v430
        %v477 = vpack.c.b16 %v433, %v431
        %v478 = vpack.c.b16 %v436, %v434
        %v479 = vpack.c.b16 %v437, %v435
        %v480 = vpack.c.b16 %v440, %v438
        %v481 = vpack.c.b16 %v441, %v439
        %v482 = vpack.c.b16 %v444, %v442
        %v483 = vpack.c.b16 %v445, %v443
        %v484 = vpack.c.b16 %v448, %v446
        %v485 = vpack.c.b16 %v449, %v447
        %v486 = vpack.c.b16 %v452, %v450
        %v487 = vpack.c.b16 %v453, %v451
        %v488 = vpack.c.b16 %v456, %v454
        %v489 = vpack.c.b16 %v457, %v455
        %v554 = vunpack.c.l.b16 %v330
        %v555 = vunpack.c.l.b16 %v331
        %v556 = vunpack.c.l.b16 %v332
        %v557 = vunpack.c.l.b16 %v333
        %v558 = vunpack.c.l.b16 %v334
        %v559 = vunpack.c.l.b16 %v335
        %v560 = vunpack.c.l.b16 %v336
        %v561 = vunpack.c.l.b16 %v337
        %v562 = vunpack.c.l.b16 %v338
        %v563 = vunpack.c.l.b16 %v339
        %v564 = vunpack.c.l.b16 %v340
        %v565 = vunpack.c.l.b16 %v341
        %v566 = vunpack.c.l.b16 %v342
        %v567 = vunpack.c.l.b16 %v343
        %v568 = vunpack.c.l.b16 %v344
        %v569 = vunpack.c.l.b16 %v345
        %v570 = vunpack.c.l.b16 %v346
        %v571 = vunpack.c.l.b16 %v347
        %v572 = vunpack.c.l.b16 %v348
        %v573 = vunpack.c.l.b16 %v349
        %v574 = vunpack.c.l.b16 %v350
        %v575 = vunpack.c.l.b16 %v351
        %v576 = vunpack.c.l.b16 %v352
        %v577 = vunpack.c.l.b16 %v353
        %v578 = vunpack.c.l.b16 %v354
        %v579 = vunpack.c.l.b16 %v355
        %v580 = vunpack.c.l.b16 %v356
        %v581 = vunpack.c.l.b16 %v357
        %v582 = vunpack.c.l.b16 %v358
        %v583 = vunpack.c.l.b16 %v359
        %v584 = vunpack.c.l.b16 %v360
        %v585 = vunpack.c.l.b16 %v361
        %v586 = vpack.c.b16 %v555, %v554
        %v587 = vpack.c.b16 %v557, %v556
        %v588 = vpack.c.b16 %v559, %v558
        %v589 = vpack.c.b16 %v561, %v560
        %v590 = vpack.c.b16 %v563, %v562
        %v591 = vpack.c.b16 %v565, %v564
        %v592 = vpack.c.b16 %v567, %v566
        %v593 = vpack.c.b16 %v569, %v568
        %v594 = vpack.c.b16 %v571, %v570
        %v595 = vpack.c.b16 %v573, %v572
        %v596 = vpack.c.b16 %v575, %v574
        %v597 = vpack.c.b16 %v577, %v576
        %v598 = vpack.c.b16 %v579, %v578
        %v599 = vpack.c.b16 %v581, %v580
        %v600 = vpack.c.b16 %v583, %v582
        %v601 = vpack.c.b16 %v585, %v584
        %618 = vmatprep.subr.bf16.mxu0 0
        %619 = vmatpush1.bf16.msra.mxu0 %v586
        %620 = vmatprep.subr.bf16.mxu0 0
        %621 = vmatpush1.bf16.msra.mxu0 %v587
        %622 = vmatprep.subr.bf16.mxu0 0
        %623 = vmatpush1.bf16.msra.mxu0 %v588
        %624 = vmatprep.subr.bf16.mxu0 0
        %625 = vmatpush1.bf16.msra.mxu0 %v589
        %626 = vmatprep.subr.bf16.mxu0 0
        %627 = vmatpush1.bf16.msra.mxu0 %v590
        %628 = vmatprep.subr.bf16.mxu0 0
        %629 = vmatpush1.bf16.msra.mxu0 %v591
        %630 = vmatprep.subr.bf16.mxu0 0
        %631 = vmatpush1.bf16.msra.mxu0 %v592
        %632 = vmatprep.subr.bf16.mxu0 0
        %633 = vmatpush1.bf16.msra.mxu0 %v593
        %634 = vmatprep.subr.bf16.mxu0 0
        %635 = vmatpush1.bf16.msra.mxu0 %v594
        %636 = vmatprep.subr.bf16.mxu0 0
        %637 = vmatpush1.bf16.msra.mxu0 %v595
        %638 = vmatprep.subr.bf16.mxu0 0
        %639 = vmatpush1.bf16.msra.mxu0 %v596
        %640 = vmatprep.subr.bf16.mxu0 0
        %641 = vmatpush1.bf16.msra.mxu0 %v597
        %642 = vmatprep.subr.bf16.mxu0 0
        %643 = vmatpush1.bf16.msra.mxu0 %v598
        %644 = vmatprep.subr.bf16.mxu0 0
        %645 = vmatpush1.bf16.msra.mxu0 %v599
        %646 = vmatprep.subr.bf16.mxu0 0
        %647 = vmatpush1.bf16.msra.mxu0 %v600
        %648 = vmatprep.subr.bf16.mxu0 0
        %649 = vmatpush1.bf16.msra.mxu0 %v601
        %650 = vmatprep.mubr.bf16.mxu0 %v459
        %651 = vmatmul.mubr.bf16.gmra.mrb[0].mxu0 %v458
        %v652 = vpop.f32.mrb[0].mxu0
        %v653 = vadd.f32 0.0, %v652
        %v654 = vpop.f32.mrb[0].mxu0
        %v655 = vpop.f32.mrb[0].mxu0
        %v656 = vadd.f32 0.0, %v655
        %v657 = vpop.f32.mrb[0].mxu0
        %658 = vmatprep.mubr.bf16.mxu0 %v461
        %659 = vmatmul.mubr.bf16.gmra.mrb[0].mxu0 %v460
        %v660 = vpop.f32.mrb[0].mxu0
        %v661 = vadd.f32 0.0, %v660
        %v662 = vpop.f32.mrb[0].mxu0
        %v663 = vpop.f32.mrb[0].mxu0
        %v664 = vadd.f32 0.0, %v663
        %v665 = vpop.f32.mrb[0].mxu0
        %666 = vmatprep.mubr.bf16.mxu0 %v463
        %667 = vmatmul.mubr.bf16.gmra.mrb[0].mxu0 %v462
        %v668 = vpop.f32.mrb[0].mxu0
        %v669 = vadd.f32 0.0, %v668
        %v670 = vpop.f32.mrb[0].mxu0
        %v671 = vpop.f32.mrb[0].mxu0
        %v672 = vadd.f32 0.0, %v671
        %v673 = vpop.f32.mrb[0].mxu0
        %674 = vmatprep.mubr.bf16.mxu0 %v465
        %675 = vmatmul.mubr.bf16.gmra.mrb[0].mxu0 %v464
        %v676 = vpop.f32.mrb[0].mxu0
        %v677 = vadd.f32 0.0, %v676
        %v678 = vpop.f32.mrb[0].mxu0
        %v679 = vpop.f32.mrb[0].mxu0
        %v680 = vadd.f32 0.0, %v679
        %v681 = vpop.f32.mrb[0].mxu0
        %682 = vmatprep.mubr.bf16.mxu0 %v467
        %683 = vmatmul.mubr.bf16.gmra.mrb[0].mxu0 %v466
        %v684 = vpop.f32.mrb[0].mxu0
        %v685 = vadd.f32 0.0, %v684
        %v686 = vpop.f32.mrb[0].mxu0
        %v687 = vpop.f32.mrb[0].mxu0
        %v688 = vadd.f32 0.0, %v687
        %v689 = vpop.f32.mrb[0].mxu0
        %690 = vmatprep.mubr.bf16.mxu0 %v469
        %691 = vmatmul.mubr.bf16.gmra.mrb[0].mxu0 %v468
        %v692 = vpop.f32.mrb[0].mxu0
        %v693 = vadd.f32 0.0, %v692
        %v694 = vpop.f32.mrb[0].mxu0
        %v695 = vpop.f32.mrb[0].mxu0
        %v696 = vadd.f32 0.0, %v695
        %v697 = vpop.f32.mrb[0].mxu0
        %698 = vmatprep.mubr.bf16.mxu0 %v471
        %699 = vmatmul.mubr.bf16.gmra.mrb[0].mxu0 %v470
        %v700 = vpop.f32.mrb[0].mxu0
        %v701 = vadd.f32 0.0, %v700
        %v702 = vpop.f32.mrb[0].mxu0
        %v703 = vpop.f32.mrb[0].mxu0
        %v704 = vadd.f32 0.0, %v703
        %v705 = vpop.f32.mrb[0].mxu0
        %706 = vmatprep.mubr.bf16.mxu0 %v473
        %707 = vmatmul.mubr.bf16.gmra.mrb[0].mxu0 %v472
        %v708 = vpop.f32.mrb[0].mxu0
        %v709 = vadd.f32 0.0, %v708
        %v710 = vpop.f32.mrb[0].mxu0
        %v711 = vpop.f32.mrb[0].mxu0
        %v712 = vadd.f32 0.0, %v711
        %v713 = vpop.f32.mrb[0].mxu0
        %714 = vmatprep.mubr.bf16.mxu0 %v475
        %715 = vmatmul.mubr.bf16.gmra.mrb[0].mxu0 %v474
        %v716 = vpop.f32.mrb[0].mxu0
        %v717 = vadd.f32 0.0, %v716
        %v718 = vpop.f32.mrb[0].mxu0
        %v719 = vpop.f32.mrb[0].mxu0
        %v720 = vadd.f32 0.0, %v719
        %v721 = vpop.f32.mrb[0].mxu0
        %722 = vmatprep.mubr.bf16.mxu0 %v477
        %723 = vmatmul.mubr.bf16.gmra.mrb[0].mxu0 %v476
        %v724 = vpop.f32.mrb[0].mxu0
        %v725 = vadd.f32 0.0, %v724
        %v726 = vpop.f32.mrb[0].mxu0
        %v727 = vpop.f32.mrb[0].mxu0
        %v728 = vadd.f32 0.0, %v727
        %v729 = vpop.f32.mrb[0].mxu0
        %730 = vmatprep.mubr.bf16.mxu0 %v479
        %731 = vmatmul.mubr.bf16.gmra.mrb[0].mxu0 %v478
        %v732 = vpop.f32.mrb[0].mxu0
        %v733 = vadd.f32 0.0, %v732
        %v734 = vpop.f32.mrb[0].mxu0
        %v735 = vpop.f32.mrb[0].mxu0
        %v736 = vadd.f32 0.0, %v735
        %v737 = vpop.f32.mrb[0].mxu0
        %738 = vmatprep.mubr.bf16.mxu0 %v481
        %739 = vmatmul.mubr.bf16.gmra.mrb[0].mxu0 %v480
        %v740 = vpop.f32.mrb[0].mxu0
        %v741 = vadd.f32 0.0, %v740
        %v742 = vpop.f32.mrb[0].mxu0
        %v743 = vpop.f32.mrb[0].mxu0
        %v744 = vadd.f32 0.0, %v743
        %v745 = vpop.f32.mrb[0].mxu0
        %746 = vmatprep.mubr.bf16.mxu0 %v483
        %747 = vmatmul.mubr.bf16.gmra.mrb[0].mxu0 %v482
        %v748 = vpop.f32.mrb[0].mxu0
        %v749 = vadd.f32 0.0, %v748
        %v750 = vpop.f32.mrb[0].mxu0
        %v751 = vpop.f32.mrb[0].mxu0
        %v752 = vadd.f32 0.0, %v751
        %v753 = vpop.f32.mrb[0].mxu0
        %754 = vmatprep.mubr.bf16.mxu0 %v485
        %755 = vmatmul.mubr.bf16.gmra.mrb[0].mxu0 %v484
        %v756 = vpop.f32.mrb[0].mxu0
        %v757 = vadd.f32 0.0, %v756
        %v758 = vpop.f32.mrb[0].mxu0
        %v759 = vpop.f32.mrb[0].mxu0
        %v760 = vadd.f32 0.0, %v759
        %v761 = vpop.f32.mrb[0].mxu0
        %762 = vmatprep.mubr.bf16.mxu0 %v487
        %763 = vmatmul.mubr.bf16.gmra.mrb[0].mxu0 %v486
        %v764 = vpop.f32.mrb[0].mxu0
        %v765 = vadd.f32 0.0, %v764
        %v766 = vpop.f32.mrb[0].mxu0
        %v767 = vpop.f32.mrb[0].mxu0
        %v768 = vadd.f32 0.0, %v767
        %v769 = vpop.f32.mrb[0].mxu0
        %770 = vmatprep.mubr.bf16.mxu0 %v489
        %771 = vmatmul.mubr.bf16.gmra.mrb[0].mxu0 %v488
        %v772 = vpop.f32.mrb[0].mxu0
        %v773 = vadd.f32 0.0, %v772
        %v774 = vpop.f32.mrb[0].mxu0
        %v775 = vpop.f32.mrb[0].mxu0
        %v776 = vadd.f32 0.0, %v775
        %v777 = vpop.f32.mrb[0].mxu0
        %778 = vdwg.mxu0
        %v779 = vadd.f32 %v262, %v653
        %v780 = vadd.f32 %v263, %v656
        %v781 = vadd.f32 %v264, %v661
        %v782 = vadd.f32 %v265, %v664
        %v783 = vadd.f32 %v266, %v669
        %v784 = vadd.f32 %v267, %v672
        %v785 = vadd.f32 %v268, %v677
        %v786 = vadd.f32 %v269, %v680
        %v787 = vadd.f32 %v270, %v685
        %v788 = vadd.f32 %v271, %v688
        %v789 = vadd.f32 %v272, %v693
        %v790 = vadd.f32 %v273, %v696
        %v791 = vadd.f32 %v274, %v701
        %v792 = vadd.f32 %v275, %v704
        %v793 = vadd.f32 %v276, %v709
        %v794 = vadd.f32 %v277, %v712
        %v795 = vadd.f32 %v278, %v717
        %v796 = vadd.f32 %v279, %v720
        %v797 = vadd.f32 %v280, %v725
        %v798 = vadd.f32 %v281, %v728
        %v799 = vadd.f32 %v282, %v733
        %v800 = vadd.f32 %v283, %v736
        %v801 = vadd.f32 %v284, %v741
        %v802 = vadd.f32 %v285, %v744
        %v803 = vadd.f32 %v286, %v749
        %v804 = vadd.f32 %v287, %v752
        %v805 = vadd.f32 %v288, %v757
        %v806 = vadd.f32 %v289, %v760
        %v807 = vadd.f32 %v290, %v765
        %v808 = vadd.f32 %v291, %v768
        %v809 = vadd.f32 %v292, %v773
        %v810 = vadd.f32 %v293, %v776
        %811 = vst [vmem:[#allocation2] sm:$0xff] %v779
        %812 = vst [vmem:[#allocation2 + $0x8] sm:$0xff] %v780
        %813 = vst [vmem:[#allocation2 + $0x10] sm:$0xff] %v781
        %814 = vst [vmem:[#allocation2 + $0x18] sm:$0xff] %v782
        %815 = vst [vmem:[#allocation2 + $0x20] sm:$0xff] %v783
        %816 = vst [vmem:[#allocation2 + $0x28] sm:$0xff] %v784
        %817 = vst [vmem:[#allocation2 + $0x30] sm:$0xff] %v785
        %818 = vst [vmem:[#allocation2 + $0x38] sm:$0xff] %v786
        %819 = vst [vmem:[#allocation2 + $0x40] sm:$0xff] %v787
        %820 = vst [vmem:[#allocation2 + $0x48] sm:$0xff] %v788
        %821 = vst [vmem:[#allocation2 + $0x50] sm:$0xff] %v789
        %822 = vst [vmem:[#allocation2 + $0x58] sm:$0xff] %v790
        %823 = vst [vmem:[#allocation2 + $0x60] sm:$0xff] %v791
        %824 = vst [vmem:[#allocation2 + $0x68] sm:$0xff] %v792
        %825 = vst [vmem:[#allocation2 + $0x70] sm:$0xff] %v793
        %826 = vst [vmem:[#allocation2 + $0x78] sm:$0xff] %v794
        %827 = vst [vmem:[#allocation2 + $0x80] sm:$0xff] %v795
        %828 = vst [vmem:[#allocation2 + $0x88] sm:$0xff] %v796
        %829 = vst [vmem:[#allocation2 + $0x90] sm:$0xff] %v797
        %830 = vst [vmem:[#allocation2 + $0x98] sm:$0xff] %v798
        %831 = vst [vmem:[#allocation2 + $0xa0] sm:$0xff] %v799
        %832 = vst [vmem:[#allocation2 + $0xa8] sm:$0xff] %v800
        %833 = vst [vmem:[#allocation2 + $0xb0] sm:$0xff] %v801
        %834 = vst [vmem:[#allocation2 + $0xb8] sm:$0xff] %v802
        %835 = vst [vmem:[#allocation2 + $0xc0] sm:$0xff] %v803
        %836 = vst [vmem:[#allocation2 + $0xc8] sm:$0xff] %v804
        %837 = vst [vmem:[#allocation2 + $0xd0] sm:$0xff] %v805
        %838 = vst [vmem:[#allocation2 + $0xd8] sm:$0xff] %v806
        %839 = vst [vmem:[#allocation2 + $0xe0] sm:$0xff] %v807
        %840 = vst [vmem:[#allocation2 + $0xe8] sm:$0xff] %v808
        %841 = vst [vmem:[#allocation2 + $0xf0] sm:$0xff] %v809
        %842 = vst [vmem:[#allocation2 + $0xf8] sm:$0xff] %v810
        // Predicated region
        $region45: #{tpu_custom_call.1} parent=31 // pred_check
          %p843 = pneg %p225
        $region46: #{tpu_custom_call.1} parent=31 // pred_check_branch
          %845 = sbr.rel (%p843) target = $region48
        $region47: #{tpu_custom_call.1} parent=31 // pred_region
          %v846 = vld [vmem:[#allocation2] sm:$0xff]
          %v847 = vld [vmem:[#allocation2 + $0x8] sm:$0xff]
          %v848 = vld [vmem:[#allocation2 + $0x10] sm:$0xff]
          %v849 = vld [vmem:[#allocation2 + $0x18] sm:$0xff]
          %v850 = vld [vmem:[#allocation2 + $0x20] sm:$0xff]
          %v851 = vld [vmem:[#allocation2 + $0x28] sm:$0xff]
          %v852 = vld [vmem:[#allocation2 + $0x30] sm:$0xff]
          %v853 = vld [vmem:[#allocation2 + $0x38] sm:$0xff]
          %v854 = vld [vmem:[#allocation2 + $0x40] sm:$0xff]
          %v855 = vld [vmem:[#allocation2 + $0x48] sm:$0xff]
          %v856 = vld [vmem:[#allocation2 + $0x50] sm:$0xff]
          %v857 = vld [vmem:[#allocation2 + $0x58] sm:$0xff]
          %v858 = vld [vmem:[#allocation2 + $0x60] sm:$0xff]
          %v859 = vld [vmem:[#allocation2 + $0x68] sm:$0xff]
          %v860 = vld [vmem:[#allocation2 + $0x70] sm:$0xff]
          %v861 = vld [vmem:[#allocation2 + $0x78] sm:$0xff]
          %v862 = vld [vmem:[#allocation2 + $0x80] sm:$0xff]
          %v863 = vld [vmem:[#allocation2 + $0x88] sm:$0xff]
          %v864 = vld [vmem:[#allocation2 + $0x90] sm:$0xff]
          %v865 = vld [vmem:[#allocation2 + $0x98] sm:$0xff]
          %v866 = vld [vmem:[#allocation2 + $0xa0] sm:$0xff]
          %v867 = vld [vmem:[#allocation2 + $0xa8] sm:$0xff]
          %v868 = vld [vmem:[#allocation2 + $0xb0] sm:$0xff]
          %v869 = vld [vmem:[#allocation2 + $0xb8] sm:$0xff]
          %v870 = vld [vmem:[#allocation2 + $0xc0] sm:$0xff]
          %v871 = vld [vmem:[#allocation2 + $0xc8] sm:$0xff]
          %v872 = vld [vmem:[#allocation2 + $0xd0] sm:$0xff]
          %v873 = vld [vmem:[#allocation2 + $0xd8] sm:$0xff]
          %v874 = vld [vmem:[#allocation2 + $0xe0] sm:$0xff]
          %v875 = vld [vmem:[#allocation2 + $0xe8] sm:$0xff]
          %v876 = vld [vmem:[#allocation2 + $0xf0] sm:$0xff]
          %v877 = vld [vmem:[#allocation2 + $0xf8] sm:$0xff]
          %v878 = vld [vmem:[%s2] sm:$0x1]
          %v880 = vlaneseq
          %v881 = vshrl.u32 %v880, 7
          %v882 = vsub.s32 0, %v881
          %v883 = vrot.slane %v878, %v882
          %v885 = vadd.f32 %v846, %v883
          %v886 = vadd.f32 %v847, %v883
          %v887 = vadd.f32 %v848, %v883
          %v888 = vadd.f32 %v849, %v883
          %v889 = vadd.f32 %v850, %v883
          %v890 = vadd.f32 %v851, %v883
          %v891 = vadd.f32 %v852, %v883
          %v892 = vadd.f32 %v853, %v883
          %v893 = vadd.f32 %v854, %v883
          %v894 = vadd.f32 %v855, %v883
          %v895 = vadd.f32 %v856, %v883
          %v896 = vadd.f32 %v857, %v883
          %v897 = vadd.f32 %v858, %v883
          %v898 = vadd.f32 %v859, %v883
          %v899 = vadd.f32 %v860, %v883
          %v900 = vadd.f32 %v861, %v883
          %v901 = vadd.f32 %v862, %v883
          %v902 = vadd.f32 %v863, %v883
          %v903 = vadd.f32 %v864, %v883
          %v904 = vadd.f32 %v865, %v883
          %v905 = vadd.f32 %v866, %v883
          %v906 = vadd.f32 %v867, %v883
          %v907 = vadd.f32 %v868, %v883
          %v908 = vadd.f32 %v869, %v883
          %v909 = vadd.f32 %v870, %v883
          %v910 = vadd.f32 %v871, %v883
          %v911 = vadd.f32 %v872, %v883
          %v912 = vadd.f32 %v873, %v883
          %v913 = vadd.f32 %v874, %v883
          %v914 = vadd.f32 %v875, %v883
          %v915 = vadd.f32 %v876, %v883
          %v916 = vadd.f32 %v877, %v883
          %v917 = vpack.c.bf16 %v886, %v885
          %v918 = vpack.c.bf16 %v888, %v887
          %v919 = vpack.c.bf16 %v890, %v889
          %v920 = vpack.c.bf16 %v892, %v891
          %v921 = vpack.c.bf16 %v894, %v893
          %v922 = vpack.c.bf16 %v896, %v895
          %v923 = vpack.c.bf16 %v898, %v897
          %v924 = vpack.c.bf16 %v900, %v899
          %v925 = vpack.c.bf16 %v902, %v901
          %v926 = vpack.c.bf16 %v904, %v903
          %v927 = vpack.c.bf16 %v906, %v905
          %v928 = vpack.c.bf16 %v908, %v907
          %v929 = vpack.c.bf16 %v910, %v909
          %v930 = vpack.c.bf16 %v912, %v911
          %v931 = vpack.c.bf16 %v914, %v913
          %v932 = vpack.c.bf16 %v916, %v915
          %v949 = vunpack.c.l.b16 %v917
          %v950 = vunpack.c.h.b16 %v917
          %v951 = vunpack.c.l.b16 %v918
          %v952 = vunpack.c.h.b16 %v918
          %v953 = vunpack.c.l.b16 %v919
          %v954 = vunpack.c.h.b16 %v919
          %v955 = vunpack.c.l.b16 %v920
          %v956 = vunpack.c.h.b16 %v920
          %v957 = vunpack.c.l.b16 %v921
          %v958 = vunpack.c.h.b16 %v921
          %v959 = vunpack.c.l.b16 %v922
          %v960 = vunpack.c.h.b16 %v922
          %v961 = vunpack.c.l.b16 %v923
          %v962 = vunpack.c.h.b16 %v923
          %v963 = vunpack.c.l.b16 %v924
          %v964 = vunpack.c.h.b16 %v924
          %v965 = vunpack.c.l.b16 %v925
          %v966 = vunpack.c.h.b16 %v925
          %v967 = vunpack.c.l.b16 %v926
          %v968 = vunpack.c.h.b16 %v926
          %v969 = vunpack.c.l.b16 %v927
          %v970 = vunpack.c.h.b16 %v927
          %v971 = vunpack.c.l.b16 %v928
          %v972 = vunpack.c.h.b16 %v928
          %v973 = vunpack.c.l.b16 %v929
          %v974 = vunpack.c.h.b16 %v929
          %v975 = vunpack.c.l.b16 %v930
          %v976 = vunpack.c.h.b16 %v930
          %v977 = vunpack.c.l.b16 %v931
          %v978 = vunpack.c.h.b16 %v931
          %v979 = vunpack.c.l.b16 %v932
          %v980 = vunpack.c.h.b16 %v932
          %v981 = vpack.c.b16 %v949, %v949
          %v982 = vpack.c.b16 %v950, %v950
          %v983 = vpack.c.b16 %v951, %v951
          %v984 = vpack.c.b16 %v952, %v952
          %v985 = vpack.c.b16 %v953, %v953
          %v986 = vpack.c.b16 %v954, %v954
          %v987 = vpack.c.b16 %v955, %v955
          %v988 = vpack.c.b16 %v956, %v956
          %v989 = vpack.c.b16 %v957, %v957
          %v990 = vpack.c.b16 %v958, %v958
          %v991 = vpack.c.b16 %v959, %v959
          %v992 = vpack.c.b16 %v960, %v960
          %v993 = vpack.c.b16 %v961, %v961
          %v994 = vpack.c.b16 %v962, %v962
          %v995 = vpack.c.b16 %v963, %v963
          %v996 = vpack.c.b16 %v964, %v964
          %v997 = vpack.c.b16 %v965, %v965
          %v998 = vpack.c.b16 %v966, %v966
          %v999 = vpack.c.b16 %v967, %v967
          %v1000 = vpack.c.b16 %v968, %v968
          %v1001 = vpack.c.b16 %v969, %v969
          %v1002 = vpack.c.b16 %v970, %v970
          %v1003 = vpack.c.b16 %v971, %v971
          %v1004 = vpack.c.b16 %v972, %v972
          %v1005 = vpack.c.b16 %v973, %v973
          %v1006 = vpack.c.b16 %v974, %v974
          %v1007 = vpack.c.b16 %v975, %v975
          %v1008 = vpack.c.b16 %v976, %v976
          %v1009 = vpack.c.b16 %v977, %v977
          %v1010 = vpack.c.b16 %v978, %v978
          %v1011 = vpack.c.b16 %v979, %v979
          %v1012 = vpack.c.b16 %v980, %v980
          %1045 = vst [vmem:[%s220] sm:$0xf] %v981
          %1046 = vst [vmem:[%s220 + $0x4] sm:$0xf] %v982
          %1047 = vst [vmem:[%s220 + $0x8] sm:$0xf] %v983
          %1048 = vst [vmem:[%s220 + $0xc] sm:$0xf] %v984
          %1049 = vst [vmem:[%s220 + $0x10] sm:$0xf] %v985
          %1050 = vst [vmem:[%s220 + $0x14] sm:$0xf] %v986
          %1051 = vst [vmem:[%s220 + $0x18] sm:$0xf] %v987
          %1052 = vst [vmem:[%s220 + $0x1c] sm:$0xf] %v988
          %1053 = vst [vmem:[%s220 + $0x20] sm:$0xf] %v989
          %1054 = vst [vmem:[%s220 + $0x24] sm:$0xf] %v990
          %1055 = vst [vmem:[%s220 + $0x28] sm:$0xf] %v991
          %1056 = vst [vmem:[%s220 + $0x2c] sm:$0xf] %v992
          %1057 = vst [vmem:[%s220 + $0x30] sm:$0xf] %v993
          %1058 = vst [vmem:[%s220 + $0x34] sm:$0xf] %v994
          %1059 = vst [vmem:[%s220 + $0x38] sm:$0xf] %v995
          %1060 = vst [vmem:[%s220 + $0x3c] sm:$0xf] %v996
          %1061 = vst [vmem:[%s220 + $0x40] sm:$0xf] %v997
          %1062 = vst [vmem:[%s220 + $0x44] sm:$0xf] %v998
          %1063 = vst [vmem:[%s220 + $0x48] sm:$0xf] %v999
          %1064 = vst [vmem:[%s220 + $0x4c] sm:$0xf] %v1000
          %1065 = vst [vmem:[%s220 + $0x50] sm:$0xf] %v1001
          %1066 = vst [vmem:[%s220 + $0x54] sm:$0xf] %v1002
          %1067 = vst [vmem:[%s220 + $0x58] sm:$0xf] %v1003
          %1068 = vst [vmem:[%s220 + $0x5c] sm:$0xf] %v1004
          %1069 = vst [vmem:[%s220 + $0x60] sm:$0xf] %v1005
          %1070 = vst [vmem:[%s220 + $0x64] sm:$0xf] %v1006
          %1071 = vst [vmem:[%s220 + $0x68] sm:$0xf] %v1007
          %1072 = vst [vmem:[%s220 + $0x6c] sm:$0xf] %v1008
          %1073 = vst [vmem:[%s220 + $0x70] sm:$0xf] %v1009
          %1074 = vst [vmem:[%s220 + $0x74] sm:$0xf] %v1010
          %1075 = vst [vmem:[%s220 + $0x78] sm:$0xf] %v1011
          %1076 = vst [vmem:[%s220 + $0x7c] sm:$0xf] %v1012
        $region48: #{tpu_custom_call.1} parent=31 // pred_fallthru
          _
        %s1077 = sand.u32 %s111, 1
        %s1078 = scalar_lea.sflag [#allocation5], %s1077
        %s1079 = sand.u32 %s111, 1
        %s1080 = smul.addr %s1079, 128
        %s1081 = scalar_lea.vmem [#allocation8], %s1080
        // Predicated region
        $region49: #{tpu_custom_call.1} parent=31 // pred_check
          %p1082 = pneg %p121
        $region50: #{tpu_custom_call.1} parent=31 // pred_check_branch
          %1084 = sbr.rel (%p1082) target = $region52
        $region51: #{tpu_custom_call.1} parent=31 // pred_region
          %s1085 = smul.u32 32, %s25
          %s1087 = ssub.s32 2048, 2048
          %1088 = vsyncadd %s1078, %s1087
          %s1089 = smul.addr %s1085, 64
          %s1090 = scalar_lea.hbm %s3, %s1089
          %s1091 = sshll.u32 %s1081, 4
          %s1092 = int_to_ptr.vmem [resolvable:$true] %s1091
          %1097 = dma.vmem_to_hbm [thread:$0]  %s1092, 2048, %s1090, %s1078, 64, 64, 4
        $region52: #{tpu_custom_call.1} parent=31 // pred_fallthru
          _
      $region32: #{tpu_custom_call.1} parent=5 // pred_fallthru
        _
      %p1098 = scmp.le.s32.totalorder 2, %s16
      // Predicated region
      $region53: #{tpu_custom_call.1} parent=5 // pred_check
        %p1099 = pneg %p1098
      $region54: #{tpu_custom_call.1} parent=5 // pred_check_branch
        %1101 = sbr.rel (%p1099) target = $region56
      $region55: #{tpu_custom_call.1} parent=5 // pred_region
        %s1102 = ssub.s32 %s16, 2
        // Predicated region
        $region57: #{tpu_custom_call.1} parent=55 // pred_check
          %p1103 = pneg %p127
        $region58: #{tpu_custom_call.1} parent=55 // pred_check_branch
          %1105 = sbr.rel (%p1103) target = $region60
        $region59: #{tpu_custom_call.1} parent=55 // pred_region
          %s1106 = sand.u32 %s112, 1
          %s1107 = scalar_lea.sflag [#allocation5], %s1106
          %s1108 = sand.u32 %s112, 1
          %s1109 = smul.addr %s1108, 128
          %s1110 = scalar_lea.vmem [#allocation8], %s1109
          %1111 = dma.done %s1107, 2048
        $region60: #{tpu_custom_call.1} parent=55 // pred_fallthru
          _
      $region56: #{tpu_custom_call.1} parent=5 // pred_fallthru
        _
    $region6: #{tpu_custom_call.1} parent=1 // loop_footer
      %s20 = sadd.s32 1, %s16
    $region7: #{tpu_custom_call.1} parent=1 // loop_footer_branch
      %15 = sbr.rel target = $region3
    $region8: #{tpu_custom_call.1} parent=1 // loop_exit
      _
    %1112 = vsyncpa [#allocation4], 1
    %s1113 = scalar_lea.sflag [#allocation4], 1
    %1114 = vsyncpa %s1113, 1
    %1115 = vsyncpa [#allocation7], 1
    %1116 = vsyncpa [#allocation5], 1
    %s1117 = scalar_lea.sflag [#allocation5], 1
    %1118 = vsyncpa %s1117, 1

</llo_original>
